<compile_context>
chip_gen: v7x
topology: tpu7x:2x2x1
jax: 0.10.0
libtpu: 0.0.40
codegen_flags: <defaults>
</compile_context>

<pallas_src>
import functools

import numpy as np
import jax
import jax.numpy as jnp
from jax.experimental import pallas as pl
from jax.experimental.pallas import tpu as pltpu


# ---------------- group machinery (glue, mirrors EquiNLG helpers) --------------

def cyclic_group_generator(vocab_size, group_size, eq_indices):
    """Permutation that cyclically shifts each consecutive chunk of eq_indices."""
    g = np.arange(vocab_size)
    for c in range(0, len(eq_indices), group_size):
        chunk = eq_indices[c:c + group_size]
        for j, idx in enumerate(chunk):
            g[idx] = chunk[(j + 1) % len(chunk)]
    return g


def cyclic_group(g, group_size, vocab_size):
    """[G, V] stack of permutations g^0, g^1, ..., g^{G-1}."""
    elems = [np.arange(vocab_size)]
    for _ in range(group_size - 1):
        elems.append(g[elems[-1]])
    return np.stack(elems)


# ---------------- Pallas kernel -------------------------------------------------

def requillm_kernel(x_ref, w1_ref, b1_ref, w2f_ref, b2s_ref, lab_ref,
                    logits_ref, loss_ref, *, vocab_size):
    """
    x_ref     : [G*R, H]   bf16  embedded group-transformed inputs (group-major rows)
    w1_ref    : [H, H]     bf16
    b1_ref    : [1, H]     f32
    w2f_ref   : [G, H, VP] bf16  second-layer weights with (vocab un-permutation *
                                 relaxed group mask * 1/G) pre-folded in; vocab
                                 zero-padded to VP = multiple of 128 lanes
    b2s_ref   : [1, VP]    f32   folded + group-summed second-layer bias
    lab_ref   : [R, 1]     int32 shifted labels, -1 = ignore position
    logits_ref: [R, VP]    f32   output logits (group mean), lane-dense
    loss_ref  : [1, 1]     f32   SMEM scalar: shifted cross-entropy loss
    """
    G, _, VP = w2f_ref.shape
    rows = logits_ref.shape[0]

    # pre_model head: single MXU matmul over all group elements (M = G*rows)
    h = jnp.dot(x_ref[...], w1_ref[...],
                preferred_element_type=jnp.float32) + b1_ref[...]
    h = jnp.maximum(h, 0.0).astype(jnp.bfloat16)               # [G*rows, H]
    h3 = h.reshape(G, rows, h.shape[-1])                       # free leading split

    # second layer: un-permutation, relaxed mask and the 1/G mean are all folded
    # into w2f/b2s, so the group reduction is just G accumulated small dots.
    acc = jnp.zeros((rows, VP), jnp.float32)
    for g in range(G):                                          # static, tiny group
        acc = acc + jnp.dot(h3[g], w2f_ref[g],
                            preferred_element_type=jnp.float32)
    logits = acc + b2s_ref[...]
    logits_ref[...] = logits                                    # full-lane stores

    # compute_loss: CrossEntropyLoss(logits[:, :-1, :], labels[:, 1:]) via a label
    # gather (iota == label select) instead of a one-hot [R, V] input.
    col = jax.lax.broadcasted_iota(jnp.int32, (rows, VP), 1)
    real = col < vocab_size                                     # mask vocab padding
    ml = jnp.where(real, logits, jnp.float32(-1e30))
    m = jnp.max(ml, axis=-1, keepdims=True)
    lse = jnp.log(jnp.sum(jnp.exp(ml - m), axis=-1, keepdims=True)) + m
    lab = lab_ref[...]                                          # [rows, 1] int32
    valid = (lab >= 0).astype(jnp.float32)
    picked = jnp.sum(jnp.where(col == lab, logits, 0.0), axis=-1, keepdims=True)
    per_pos = (lse - picked) * valid
    den = jnp.maximum(jnp.sum(valid), 1.0)
    loss_ref[0, 0] = jnp.sum(per_pos) / den


# ---------------- wrapper -------------------------------------------------------

class REquiLLMPallas:
    def __init__(self, key, group_size=2, vocab_size=8,
                 eq_word_indices=(2, 7), neutral_word_indices=(5, 6),
                 hidden=32):
        self.vocab_size = vocab_size
        self.group_size = group_size
        self.hidden = hidden
        self.vocab_pad = max(128, -(-vocab_size // 128) * 128)   # lane-dense V

        V, G, H, VP = vocab_size, group_size, hidden, self.vocab_pad

        # group elements (in_G: input-token transform, out_G: logits un-transform)
        g = cyclic_group_generator(V, G, list(eq_word_indices))
        self.in_G = cyclic_group(g, G, V)                        # [G, V]
        self.out_G = cyclic_group(g, G, V)                       # [G, V]
        self.perms = jnp.asarray(self.in_G, dtype=jnp.int32)
        self.out_perms = jnp.asarray(self.out_G, dtype=jnp.int32)

        # un-transform matrices: out[..., v] = in[..., out_G[g][v]]
        # TODO(synk): confirm against EquiNLG whether the un-transform should use
        # g^{-1}; kept identical to the previous (accepted) version.
        pmats = np.zeros((G, V, V), np.float32)
        for gi in range(G):
            pmats[gi, self.out_G[gi], np.arange(V)] = 1.0

        # relaxed masks (identity element vs non-identity elements)
        non_general = np.zeros((V,), np.float32)
        non_general[list(eq_word_indices) + list(neutral_word_indices)] = 1.0
        general = (1.0 - non_general) * G
        mask_rows = np.stack([non_general + general] + [non_general] * (G - 1))  # [G, V]
        self.mask_rows = jnp.asarray(mask_rows)

        # deterministic synthetic pre_model parameters (stand-in for the HF LM)
        k_emb, k_w1, k_b1, k_w2, k_b2 = jax.random.split(key, 5)
        self.emb = jax.random.normal(k_emb, (V, H), jnp.float32) * 0.05
        self.w1 = jax.random.normal(k_w1, (H, H), jnp.float32) * 0.05
        self.b1 = jax.random.normal(k_b1, (1, H), jnp.float32) * 0.05
        self.w2 = jax.random.normal(k_w2, (H, V), jnp.float32) * 0.05
        self.b2 = jax.random.normal(k_b2, (1, V), jnp.float32) * 0.05

        # ---- fold (un-permute * relaxed-mask * 1/G mean) into second-layer params:
        # logits = sum_g h_g @ (w2 @ fold_g) + sum_g b2 @ fold_g,
        # fold_g = P_g * mask_g / G
        fold = pmats * mask_rows[:, None, :] / float(G)                  # [G, V, V]
        w2f = np.einsum('hv,gvu->ghu', np.asarray(self.w2), fold)        # [G, H, V]
        b2s = np.einsum('xv,gvu->xu', np.asarray(self.b2), fold)         # [1, V]

        self.w2_fold = jnp.asarray(
            np.pad(w2f, ((0, 0), (0, 0), (0, VP - V))), dtype=jnp.bfloat16)  # [G, H, VP]
        self.b2_sum = jnp.asarray(
            np.pad(b2s, ((0, 0), (0, VP - V))), dtype=jnp.float32)          # [1, VP]
        self.w1_bf = self.w1.astype(jnp.bfloat16)

    def forward(self, input_ids, labels=None):
        B, S = input_ids.shape
        G, V, H, VP = self.group_size, self.vocab_size, self.hidden, self.vocab_pad
        BS = B * S
        BS_pad = -(-BS // 8) * 8                                 # sublane-align rows

        # g_transform_data: apply each group permutation to the token ids, embed,
        # and cast to bf16 (halves the activation DMA into VMEM).
        t_ids = jnp.take(self.perms, input_ids, axis=1)          # [G, B, S]
        x = jnp.take(self.emb, t_ids.reshape(G, BS), axis=0)     # [G, BS, H]
        if BS_pad != BS:
            x = jnp.pad(x, ((0, 0), (0, BS_pad - BS), (0, 0)))
        x = x.reshape(G * BS_pad, H).astype(jnp.bfloat16)

        # shifted labels (position t predicts labels[t+1]); -1 marks ignored rows
        if labels is None:
            lab = jnp.full((BS_pad, 1), -1, jnp.int32)
        else:
            lab_sh = jnp.concatenate(
                [labels[:, 1:].astype(jnp.int32),
                 jnp.full((B, 1), -1, jnp.int32)], axis=1)       # [B, S]
            lab = lab_sh.reshape(BS, 1)
            if BS_pad != BS:
                lab = jnp.pad(lab, ((0, BS_pad - BS), (0, 0)), constant_values=-1)

        logits_pad, loss = pl.pallas_call(
            functools.partial(requillm_kernel, vocab_size=V),
            out_shape=(jax.ShapeDtypeStruct((BS_pad, VP), jnp.float32),
                       jax.ShapeDtypeStruct((1, 1), jnp.float32)),
            in_specs=[pl.BlockSpec(memory_space=pltpu.MemorySpace.VMEM)] * 6,
            out_specs=(pl.BlockSpec(memory_space=pltpu.MemorySpace.VMEM),
                       pl.BlockSpec(memory_space=pltpu.MemorySpace.SMEM)),
        )(x, self.w1_bf, self.b1, self.w2_fold, self.b2_sum, lab)

        logits = logits_pad[:BS, :V].reshape(B, S, V)
        loss_scalar = loss[0, 0] if labels is not None else jnp.float32(0.0)
        return [loss_scalar, logits]


# ---------------- pure-JAX f32 reference (original, unfused math) ---------------

def _ref_forward(model, input_ids, labels):
    G = model.group_size
    t_ids = jnp.take(model.perms, input_ids, axis=1)                     # [G, B, S]
    x = jnp.take(model.emb, t_ids, axis=0)                               # [G, B, S, H]
    h = jnp.maximum(jnp.einsum('gbsh,hk->gbsk', x, model.w1) + model.b1[0], 0.0)
    z = jnp.einsum('gbsh,hv->gbsv', h, model.w2) + model.b2[0]           # [G, B, S, V]
    z = jnp.stack([jnp.take(z[g], model.out_perms[g], axis=-1) for g in range(G)])
    z = z * model.mask_rows[:, None, None, :]
    logits = jnp.mean(z, axis=0)                                         # [B, S, V]
    logp = jax.nn.log_softmax(logits, axis=-1)
    nll = -jnp.take_along_axis(logp[:, :-1, :], labels[:, 1:, None], axis=-1)[..., 0]
    return nll.mean(), logits


# ---------------- demo ----------------------------------------------------------

if __name__ == "__main__":
    key = jax.random.PRNGKey(0)
    k_model, k_ids = jax.random.split(key)

    B, S, V = 2, 8, 8
    model = REquiLLMPallas(k_model, group_size=2, vocab_size=V,
                           eq_word_indices=(2, 7), neutral_word_indices=(5, 6),
                           hidden=32)

    input_ids = jax.random.randint(k_ids, (B, S), 0, V, dtype=jnp.int32)
    labels = input_ids  # standard LM labels

    loss, logits = model.forward(input_ids, labels=labels)
    loss = jax.block_until_ready(loss)
    logits = jax.block_until_ready(logits)

    assert logits.shape == (B, S, V)
    assert bool(jnp.isfinite(loss)) and bool(jnp.all(jnp.isfinite(logits)))

    # check against the unfused f32 reference (kernel uses bf16 MXU operands)
    ref_loss, ref_logits = _ref_forward(model, input_ids, labels)
    assert bool(jnp.allclose(logits, ref_logits, atol=1e-2, rtol=5e-2))
    assert bool(jnp.allclose(loss, ref_loss, atol=1e-2, rtol=5e-2))

    print("KERNEL_OK")
</pallas_src>

<mosaic_0001>
module attributes {stable_mosaic.version = 11 : i64} {
  func.func @requillm_kernel(%arg0: memref<32x32xbf16, #tpu.memory_space<vmem>>, %arg1: memref<32x32xbf16, #tpu.memory_space<vmem>>, %arg2: memref<1x32xf32, #tpu.memory_space<vmem>>, %arg3: memref<2x32x128xbf16, #tpu.memory_space<vmem>>, %arg4: memref<1x128xf32, #tpu.memory_space<vmem>>, %arg5: memref<16x1xi32, #tpu.memory_space<vmem>>, %arg6: memref<16x128xf32, #tpu.memory_space<vmem>>, %arg7: memref<1x1xf32, #tpu.memory_space<smem>>) attributes {dimension_semantics = [], scalar_prefetch = 0 : i64, scratch_operands = 0 : i64, tpu.core_type = #tpu.core_type<tc>} {
    %c0 = arith.constant 0 : index
    %c0_0 = arith.constant 0 : index
    %0 = vector.load %arg0[%c0, %c0_0] : memref<32x32xbf16, #tpu.memory_space<vmem>>, vector<32x32xbf16>
    %c0_1 = arith.constant 0 : index
    %c0_2 = arith.constant 0 : index
    %1 = vector.load %arg1[%c0_1, %c0_2] : memref<32x32xbf16, #tpu.memory_space<vmem>>, vector<32x32xbf16>
    %cst = arith.constant dense<0.000000e+00> : vector<32x32xf32>
    %2 = tpu.matmul %0, %1, %cst {dimension_numbers = #tpu.dot_dimension_numbers<[1], [0], [0], [1], [0, 0, 1, 1], [], []>} : vector<32x32xbf16>, vector<32x32xbf16>, vector<32x32xf32> -> vector<32x32xf32>
    %c0_3 = arith.constant 0 : index
    %c0_4 = arith.constant 0 : index
    %3 = vector.load %arg2[%c0_3, %c0_4] : memref<1x32xf32, #tpu.memory_space<vmem>>, vector<1x32xf32>
    %4 = vector.broadcast %3 : vector<1x32xf32> to vector<32x32xf32>
    %5 = arith.addf %2, %4 : vector<32x32xf32>
    %cst_5 = arith.constant 0.000000e+00 : f32
    %6 = vector.broadcast %cst_5 : f32 to vector<32x32xf32>
    %7 = arith.maximumf %5, %6 : vector<32x32xf32>
    %8 = arith.truncf %7 : vector<32x32xf32> to vector<32x32xbf16>
    %9 = vector.shape_cast %8 : vector<32x32xbf16> to vector<2x16x32xbf16>
    %cst_6 = arith.constant 0.000000e+00 : f32
    %10 = vector.broadcast %cst_6 : f32 to vector<16x128xf32>
    %11 = vector.extract_strided_slice %9 {offsets = [0, 0, 0], sizes = [1, 16, 32], strides = [1, 1, 1]} : vector<2x16x32xbf16> to vector<1x16x32xbf16>
    %12 = vector.shape_cast %11 : vector<1x16x32xbf16> to vector<16x32xbf16>
    %c0_7 = arith.constant 0 : index
    %c0_8 = arith.constant 0 : index
    %c0_9 = arith.constant 0 : index
    %13 = vector.load %arg3[%c0_7, %c0_8, %c0_9] : memref<2x32x128xbf16, #tpu.memory_space<vmem>>, vector<1x32x128xbf16>
    %14 = vector.shape_cast %13 : vector<1x32x128xbf16> to vector<32x128xbf16>
    %cst_10 = arith.constant dense<0.000000e+00> : vector<16x128xf32>
    %15 = tpu.matmul %12, %14, %cst_10 {dimension_numbers = #tpu.dot_dimension_numbers<[1], [0], [0], [1], [0, 0, 1, 1], [], []>} : vector<16x32xbf16>, vector<32x128xbf16>, vector<16x128xf32> -> vector<16x128xf32>
    %16 = arith.addf %10, %15 : vector<16x128xf32>
    %17 = vector.extract_strided_slice %9 {offsets = [1, 0, 0], sizes = [1, 16, 32], strides = [1, 1, 1]} : vector<2x16x32xbf16> to vector<1x16x32xbf16>
    %18 = vector.shape_cast %17 : vector<1x16x32xbf16> to vector<16x32xbf16>
    %c1 = arith.constant 1 : index
    %c0_11 = arith.constant 0 : index
    %c0_12 = arith.constant 0 : index
    %19 = vector.load %arg3[%c1, %c0_11, %c0_12] : memref<2x32x128xbf16, #tpu.memory_space<vmem>>, vector<1x32x128xbf16>
    %20 = vector.shape_cast %19 : vector<1x32x128xbf16> to vector<32x128xbf16>
    %cst_13 = arith.constant dense<0.000000e+00> : vector<16x128xf32>
    %21 = tpu.matmul %18, %20, %cst_13 {dimension_numbers = #tpu.dot_dimension_numbers<[1], [0], [0], [1], [0, 0, 1, 1], [], []>} : vector<16x32xbf16>, vector<32x128xbf16>, vector<16x128xf32> -> vector<16x128xf32>
    %22 = arith.addf %16, %21 : vector<16x128xf32>
    %c0_14 = arith.constant 0 : index
    %c0_15 = arith.constant 0 : index
    %23 = vector.load %arg4[%c0_14, %c0_15] : memref<1x128xf32, #tpu.memory_space<vmem>>, vector<1x128xf32>
    %24 = vector.broadcast %23 : vector<1x128xf32> to vector<16x128xf32>
    %25 = arith.addf %22, %24 : vector<16x128xf32>
    %c0_16 = arith.constant 0 : index
    %c0_17 = arith.constant 0 : index
    %26 = vector.load %arg6[%c0_16, %c0_17] : memref<16x128xf32, #tpu.memory_space<vmem>>, vector<16x128xf32>
    tpu.vector_store %arg6[%c0_16, %c0_17], %25 {strides = array<i32>} : memref<16x128xf32, #tpu.memory_space<vmem>>, vector<16x128xf32>,
    %27 = tpu.iota {dimensions = array<i32: 1>} : vector<16x128xi32>
    %c8_i32 = arith.constant 8 : i32
    %28 = vector.broadcast %c8_i32 : i32 to vector<16x128xi32>
    %29 = arith.cmpi slt, %27, %28 : vector<16x128xi32>
    %cst_18 = arith.constant -1.000000e+30 : f32
    %30 = vector.broadcast %cst_18 : f32 to vector<16x128xf32>
    %31 = arith.select %29, %25, %30 : vector<16x128xi1>, vector<16x128xf32>
    %cst_19 = arith.constant dense<0xFF800000> : vector<16xf32>
    %32 = vector.multi_reduction <maximumf>, %31, %cst_19 [1] : vector<16x128xf32> to vector<16xf32>
    %33 = vector.shape_cast %32 : vector<16xf32> to vector<16x1xf32>
    %34 = vector.broadcast %33 : vector<16x1xf32> to vector<16x128xf32>
    %35 = arith.subf %31, %34 : vector<16x128xf32>
    %36 = math.exp %35 : vector<16x128xf32>
    %cst_20 = arith.constant dense<0.000000e+00> : vector<16xf32>
    %37 = vector.multi_reduction <add>, %36, %cst_20 [1] : vector<16x128xf32> to vector<16xf32>
    %38 = vector.shape_cast %37 : vector<16xf32> to vector<16x1xf32>
    %39 = math.log %38 : vector<16x1xf32>
    %40 = arith.addf %39, %33 : vector<16x1xf32>
    %c0_21 = arith.constant 0 : index
    %c0_22 = arith.constant 0 : index
    %41 = vector.load %arg5[%c0_21, %c0_22] : memref<16x1xi32, #tpu.memory_space<vmem>>, vector<16x1xi32>
    %c0_i32 = arith.constant 0 : i32
    %42 = vector.broadcast %c0_i32 : i32 to vector<16x1xi32>
    %43 = arith.cmpi sge, %41, %42 : vector<16x1xi32>
    %44 = arith.extui %43 : vector<16x1xi1> to vector<16x1xi32>
    %45 = arith.sitofp %44 : vector<16x1xi32> to vector<16x1xf32>
    %46 = vector.broadcast %41 : vector<16x1xi32> to vector<16x128xi32>
    %47 = arith.cmpi eq, %27, %46 : vector<16x128xi32>
    %cst_23 = arith.constant 0.000000e+00 : f32
    %48 = vector.broadcast %cst_23 : f32 to vector<16x128xf32>
    %49 = arith.select %47, %25, %48 : vector<16x128xi1>, vector<16x128xf32>
    %cst_24 = arith.constant dense<0.000000e+00> : vector<16xf32>
    %50 = vector.multi_reduction <add>, %49, %cst_24 [1] : vector<16x128xf32> to vector<16xf32>
    %51 = vector.shape_cast %50 : vector<16xf32> to vector<16x1xf32>
    %52 = arith.subf %40, %51 : vector<16x1xf32>
    %53 = arith.mulf %52, %45 : vector<16x1xf32>
    %54 = vector.shape_cast %45 : vector<16x1xf32> to vector<1x16x1xf32>
    %cst_25 = arith.constant dense<0.000000e+00> : vector<1xf32>
    %55 = vector.multi_reduction <add>, %54, %cst_25 [1, 2] : vector<1x16x1xf32> to vector<1xf32>
    %56 = vector.shape_cast %55 : vector<1xf32> to vector<1x1x1xf32>
    %57 = vector.extract %56[0, 0, 0] : f32 from vector<1x1x1xf32>
    %cst_26 = arith.constant 1.000000e+00 : f32
    %58 = arith.maximumf %57, %cst_26 : f32
    %59 = vector.shape_cast %53 : vector<16x1xf32> to vector<1x16x1xf32>
    %cst_27 = arith.constant dense<0.000000e+00> : vector<1xf32>
    %60 = vector.multi_reduction <add>, %59, %cst_27 [1, 2] : vector<1x16x1xf32> to vector<1xf32>
    %61 = vector.shape_cast %60 : vector<1xf32> to vector<1x1x1xf32>
    %62 = vector.extract %61[0, 0, 0] : f32 from vector<1x1x1xf32>
    %63 = arith.divf %62, %58 : f32
    %c0_28 = arith.constant 0 : index
    %c0_29 = arith.constant 0 : index
    %64 = memref.load %arg7[%c0_28, %c0_29] : memref<1x1xf32, #tpu.memory_space<smem>>
    memref.store %63, %arg7[%c0_28, %c0_29] : memref<1x1xf32, #tpu.memory_space<smem>>
    return
  }
}

</mosaic_0001>

<llo_original>
// kernel: tpu_custom_call.1
$region0: #{tpu_custom_call.1}
  #allocation0 [shape = 'u32[]', space=smem, size = 0x4, offset = 0x4, fixed_abs, tag = 'smem constant byte address 0x4 - core index']
  #allocation1 [shape = 'u32[144,128]{1,0:T(1,128)}', space=vmem, size = 0x12000, scoped, tag = 'internal scratch']
  %s0 = inlined_call_operand.vmem [shape: bf16[32,32], index: 0, kind: input, shape index: {}]
  %s1 = inlined_call_operand.hbm [shape: bf16[32,32], index: 1, kind: input, shape index: {}]
  %s2 = inlined_call_operand.vmem [shape: f32[1,32], index: 2, kind: input, shape index: {}]
  %s3 = inlined_call_operand.hbm [shape: bf16[2,32,128], index: 3, kind: input, shape index: {}]
  %s4 = inlined_call_operand.vmem [shape: f32[1,128], index: 4, kind: input, shape index: {}]
  %s5 = inlined_call_operand.vmem [shape: s32[16,1], index: 5, kind: input, shape index: {}]
  %s6 = inlined_call_operand.hbm [shape: f32[16,128], index: 6, kind: output, shape index: {0}]
  %s7 = inlined_call_operand.hbm [shape: f32[1,1], index: 7, kind: output, shape index: {1}]
  %8 = xla_tuple %s6, %s7
  %s9 = sld [smem:[#allocation0]]
  $region50: #{tpu_custom_call.1} parent=0
    _
  %s11 = ssub.s32 1, %s9
  %s12 = scalar_select 0, %s11, %s9
  $region1: #{tpu_custom_call.1} parent=0
    #allocation2 [shape = 'u8[8192]{0}', space=vmem, size = 0x2000, scoped, tag = 'input window, operand 1, single buffered']
    #allocation3 [shape = 's32[1]{0}', space=sflag, size = 0x4, scoped, tag = 'scoped memory for tpu_custom_call.1']
    #allocation4 [shape = 's32[1]{0}', space=sflag, size = 0x4, scoped, tag = 'scoped memory for tpu_custom_call.1']
    #allocation5 [shape = 's32[1]{0}', space=sflag, size = 0x4, scoped, tag = 'scoped memory for tpu_custom_call.1']
    #allocation6 [shape = 'u8[16384]{0}', space=vmem, size = 0x4000, scoped, tag = 'input window, operand 3, single buffered']
    #allocation7 [shape = 's32[1]{0}', space=sflag, size = 0x4, scoped, tag = 'scoped memory for tpu_custom_call.1']
    #allocation8 [shape = 'u8[8192]{0}', space=vmem, size = 0x2000, scoped, tag = 'output window, operand 0, single buffered']
    #allocation9 [shape = 'u8[512]{0}', space=smem, size = 0x200, scoped, tag = 'output window, operand 1, single buffered']
    %13 = vsyncpa [#allocation3], 0
    %14 = vsyncpa [#allocation7], 0
    %15 = vsyncpa [#allocation4], 0
    %16 = vsyncpa [#allocation5], 0
    // Predicated region
    $region2: #{tpu_custom_call.1} parent=1 // pred_check
      _
    $region3: #{tpu_custom_call.1} parent=1 // pred_check_branch
      %18 = sbr.rel (0) target = $region5
    $region4: #{tpu_custom_call.1} parent=1 // pred_region
      _
    $region5: #{tpu_custom_call.1} parent=1 // pred_fallthru
      _
    // Predicated region
    $region6: #{tpu_custom_call.1} parent=1 // pred_check
      _
    $region7: #{tpu_custom_call.1} parent=1 // pred_check_branch
      %20 = sbr.rel (0) target = $region9
    $region8: #{tpu_custom_call.1} parent=1 // pred_region
      %s22 = ssub.s32 256, 256
      %23 = vsyncadd [#allocation3], %s22
      %s24 = sshll.u32 [#allocation2], 4
      %s25 = int_to_ptr.vmem [resolvable:$true] %s24
      %30 = dma.hbm_to_vmem [thread:$0]  %s1, 256, %s25, [#allocation3], 64, 64, 4
    $region9: #{tpu_custom_call.1} parent=1 // pred_fallthru
      _
    // Predicated region
    $region10: #{tpu_custom_call.1} parent=1 // pred_check
      _
    $region11: #{tpu_custom_call.1} parent=1 // pred_check_branch
      %32 = sbr.rel (0) target = $region13
    $region12: #{tpu_custom_call.1} parent=1 // pred_region
      _
    $region13: #{tpu_custom_call.1} parent=1 // pred_fallthru
      _
    // Predicated region
    $region14: #{tpu_custom_call.1} parent=1 // pred_check
      _
    $region15: #{tpu_custom_call.1} parent=1 // pred_check_branch
      %34 = sbr.rel (0) target = $region17
    $region16: #{tpu_custom_call.1} parent=1 // pred_region
      %s36 = ssub.s32 512, 512
      %37 = vsyncadd [#allocation7], %s36
      %s38 = sshll.u32 [#allocation6], 4
      %s39 = int_to_ptr.vmem [resolvable:$true] %s38
      %44 = dma.hbm_to_vmem [thread:$0]  %s3, 512, %s39, [#allocation7], 64, 64, 4
    $region17: #{tpu_custom_call.1} parent=1 // pred_fallthru
      _
    // Predicated region
    $region18: #{tpu_custom_call.1} parent=1 // pred_check
      _
    $region19: #{tpu_custom_call.1} parent=1 // pred_check_branch
      %46 = sbr.rel (0) target = $region21
    $region20: #{tpu_custom_call.1} parent=1 // pred_region
      _
    $region21: #{tpu_custom_call.1} parent=1 // pred_fallthru
      _
    // Predicated region
    $region22: #{tpu_custom_call.1} parent=1 // pred_check
      _
    $region23: #{tpu_custom_call.1} parent=1 // pred_check_branch
      %48 = sbr.rel (0) target = $region25
    $region24: #{tpu_custom_call.1} parent=1 // pred_region
      _
    $region25: #{tpu_custom_call.1} parent=1 // pred_fallthru
      _
    // Predicated region
    $region26: #{tpu_custom_call.1} parent=1 // pred_check
      _
    $region27: #{tpu_custom_call.1} parent=1 // pred_check_branch
      %50 = sbr.rel (0) target = $region29
    $region28: #{tpu_custom_call.1} parent=1 // pred_region
      %51 = dma.done [#allocation3], 256
    $region29: #{tpu_custom_call.1} parent=1 // pred_fallthru
      _
    // Predicated region
    $region30: #{tpu_custom_call.1} parent=1 // pred_check
      _
    $region31: #{tpu_custom_call.1} parent=1 // pred_check_branch
      %53 = sbr.rel (0) target = $region33
    $region32: #{tpu_custom_call.1} parent=1 // pred_region
      %54 = dma.done [#allocation7], 512
    $region33: #{tpu_custom_call.1} parent=1 // pred_fallthru
      _
    %v56 = vld [vmem:[%s0] sm:$0xf]
    %v57 = vld [vmem:[%s0 + $0x4] sm:$0xf]
    %v58 = vld [vmem:[%s0 + $0x8] sm:$0xf]
    %v59 = vld [vmem:[%s0 + $0xc] sm:$0xf]
    %v60 = vld [vmem:[#allocation2] sm:$0xf]
    %v61 = vld [vmem:[#allocation2 + $0x4] sm:$0xf]
    %v62 = vld [vmem:[#allocation2 + $0x8] sm:$0xf]
    %v63 = vld [vmem:[#allocation2 + $0xc] sm:$0xf]
    %v64 = vld [vmem:[%s2] sm:$0x1]
    %v66 = vlaneseq
    %v67 = vshrl.u32 %v66, 7
    %v68 = vsub.s32 0, %v67
    %v69 = vrot.slane %v64, %v68
    %v75 = vunpack.c.l.b16 %v56
    %v76 = vunpack.c.l.b16 %v57
    %v77 = vunpack.c.l.b16 %v58
    %v78 = vunpack.c.l.b16 %v59
    %v79 = vpack.c.b16 %v76, %v75
    %v80 = vpack.c.b16 %v78, %v77
    %v85 = vunpack.c.l.b16 %v60
    %v86 = vunpack.c.l.b16 %v61
    %v87 = vunpack.c.l.b16 %v62
    %v88 = vunpack.c.l.b16 %v63
    %v89 = vpack.c.b16 %v86, %v85
    %v90 = vpack.c.b16 %v88, %v87
    %vm93 = vcmask 261120
    %v95 = vsel %vm93, %v79, 0
    %v98 = vsel %vm93, %v80, 0
    %100 = vmatprep.subr.bf16.mxu0 0
    %101 = vmatpush1.bf16.msra.mxu0 %v89
    %102 = vmatprep.subr.bf16.mxu0 0
    %103 = vmatpush1.bf16.msra.mxu0 %v90
    %104 = vmatprep.subr.bf16.mxu0 0
    %105 = vmatpush1.bf16.msra.mxu0 0
    %106 = vmatprep.subr.bf16.mxu0 0
    %107 = vmatpush1.bf16.msra.mxu0 0
    %108 = vmatprep.subr.bf16.mxu0 0
    %109 = vmatpush1.bf16.msra.mxu0 0
    %110 = vmatprep.subr.bf16.mxu0 0
    %111 = vmatpush1.bf16.msra.mxu0 0
    %112 = vmatprep.subr.bf16.mxu0 0
    %113 = vmatpush1.bf16.msra.mxu0 0
    %114 = vmatprep.subr.bf16.mxu0 0
    %115 = vmatpush1.bf16.msra.mxu0 0
    %116 = vmatprep.subr.bf16.mxu0 0
    %117 = vmatpush1.bf16.msra.mxu0 0
    %118 = vmatprep.subr.bf16.mxu0 0
    %119 = vmatpush1.bf16.msra.mxu0 0
    %120 = vmatprep.subr.bf16.mxu0 0
    %121 = vmatpush1.bf16.msra.mxu0 0
    %122 = vmatprep.subr.bf16.mxu0 0
    %123 = vmatpush1.bf16.msra.mxu0 0
    %124 = vmatprep.subr.bf16.mxu0 0
    %125 = vmatpush1.bf16.msra.mxu0 0
    %126 = vmatprep.subr.bf16.mxu0 0
    %127 = vmatpush1.bf16.msra.mxu0 0
    %128 = vmatprep.subr.bf16.mxu0 0
    %129 = vmatpush1.bf16.msra.mxu0 0
    %130 = vmatprep.subr.bf16.mxu0 0
    %131 = vmatpush1.bf16.msra.mxu0 0
    %132 = vmatprep.mubr.bf16.mxu0 0
    %133 = vmatmul.mubr.bf16.gmra.mrb[0].mxu0 %v95
    %v134 = vpop.f32.mrb[0].mxu0
    %v135 = vadd.f32 %v69, %v134
    %v136 = vpop.f32.mrb[0].mxu0
    %v137 = vpop.f32.mrb[0].mxu0
    %v138 = vadd.f32 %v69, %v137
    %v139 = vpop.f32.mrb[0].mxu0
    %140 = vmatprep.mubr.bf16.mxu0 0
    %141 = vmatmul.mubr.bf16.gmra.mrb[0].mxu0 %v98
    %v142 = vpop.f32.mrb[0].mxu0
    %v143 = vadd.f32 %v69, %v142
    %v144 = vpop.f32.mrb[0].mxu0
    %v145 = vpop.f32.mrb[0].mxu0
    %v146 = vadd.f32 %v69, %v145
    %v147 = vpop.f32.mrb[0].mxu0
    %148 = vdwg.mxu0
    %v149 = vmax.f32 %v135, 0.0
    %v150 = vmax.f32 %v138, 0.0
    %v151 = vmax.f32 %v143, 0.0
    %v152 = vmax.f32 %v146, 0.0
    %v153 = vpack.c.bf16 %v150, %v149
    %v154 = vpack.c.bf16 %v152, %v151
    %v155 = vld [vmem:[#allocation6] sm:$0xf]
    %v156 = vld [vmem:[#allocation6 + $0x4] sm:$0xf]
    %v157 = vld [vmem:[#allocation6 + $0x8] sm:$0xf]
    %v158 = vld [vmem:[#allocation6 + $0xc] sm:$0xf]
    %s159 = scalar_lea.vmem [#allocation6], 16
    %v160 = vld [vmem:[%s159] sm:$0xf]
    %v161 = vld [vmem:[%s159 + $0x4] sm:$0xf]
    %v162 = vld [vmem:[%s159 + $0x8] sm:$0xf]
    %v163 = vld [vmem:[%s159 + $0xc] sm:$0xf]
    %v168 = vunpack.c.l.b16 %v160
    %v169 = vunpack.c.l.b16 %v161
    %v170 = vunpack.c.l.b16 %v162
    %v171 = vunpack.c.l.b16 %v163
    %v172 = vpack.c.b16 %v169, %v168
    %v173 = vpack.c.b16 %v171, %v170
    %v177 = vsel %vm93, %v154, 0
    %179 = vmatprep.subr.bf16.mxu0 0
    %180 = vmatpush1.bf16.msra.mxu0 %v172
    %181 = vmatprep.subr.bf16.mxu0 0
    %182 = vmatpush1.bf16.msra.mxu0 %v173
    %183 = vmatprep.subr.bf16.mxu0 0
    %184 = vmatpush1.bf16.msra.mxu0 0
    %185 = vmatprep.subr.bf16.mxu0 0
    %186 = vmatpush1.bf16.msra.mxu0 0
    %187 = vmatprep.subr.bf16.mxu0 0
    %188 = vmatpush1.bf16.msra.mxu0 0
    %189 = vmatprep.subr.bf16.mxu0 0
    %190 = vmatpush1.bf16.msra.mxu0 0
    %191 = vmatprep.subr.bf16.mxu0 0
    %192 = vmatpush1.bf16.msra.mxu0 0
    %193 = vmatprep.subr.bf16.mxu0 0
    %194 = vmatpush1.bf16.msra.mxu0 0
    %195 = vmatprep.subr.bf16.mxu0 0
    %196 = vmatpush1.bf16.msra.mxu0 0
    %197 = vmatprep.subr.bf16.mxu0 0
    %198 = vmatpush1.bf16.msra.mxu0 0
    %199 = vmatprep.subr.bf16.mxu0 0
    %200 = vmatpush1.bf16.msra.mxu0 0
    %201 = vmatprep.subr.bf16.mxu0 0
    %202 = vmatpush1.bf16.msra.mxu0 0
    %203 = vmatprep.subr.bf16.mxu0 0
    %204 = vmatpush1.bf16.msra.mxu0 0
    %205 = vmatprep.subr.bf16.mxu0 0
    %206 = vmatpush1.bf16.msra.mxu0 0
    %207 = vmatprep.subr.bf16.mxu0 0
    %208 = vmatpush1.bf16.msra.mxu0 0
    %209 = vmatprep.subr.bf16.mxu0 0
    %210 = vmatpush1.bf16.msra.mxu0 0
    %211 = vmatprep.mubr.bf16.mxu0 0
    %212 = vmatmul.mubr.bf16.gmra.mrb[0].mxu0 %v177
    %v213 = vpop.f32.mrb[0].mxu0
    %v214 = vadd.f32 0.0, %v213
    %v215 = vpop.f32.mrb[0].mxu0
    %v216 = vpop.f32.mrb[0].mxu0
    %v217 = vadd.f32 0.0, %v216
    %v218 = vpop.f32.mrb[0].mxu0
    %219 = vdwg.mxu0
    %v224 = vunpack.c.l.b16 %v155
    %v225 = vunpack.c.l.b16 %v156
    %v226 = vunpack.c.l.b16 %v157
    %v227 = vunpack.c.l.b16 %v158
    %v228 = vpack.c.b16 %v225, %v224
    %v229 = vpack.c.b16 %v227, %v226
    %v233 = vsel %vm93, %v153, 0
    %235 = vmatprep.subr.bf16.mxu0 0
    %236 = vmatpush1.bf16.msra.mxu0 %v228
    %237 = vmatprep.subr.bf16.mxu0 0
    %238 = vmatpush1.bf16.msra.mxu0 %v229
    %239 = vmatprep.subr.bf16.mxu0 0
    %240 = vmatpush1.bf16.msra.mxu0 0
    %241 = vmatprep.subr.bf16.mxu0 0
    %242 = vmatpush1.bf16.msra.mxu0 0
    %243 = vmatprep.subr.bf16.mxu0 0
    %244 = vmatpush1.bf16.msra.mxu0 0
    %245 = vmatprep.subr.bf16.mxu0 0
    %246 = vmatpush1.bf16.msra.mxu0 0
    %247 = vmatprep.subr.bf16.mxu0 0
    %248 = vmatpush1.bf16.msra.mxu0 0
    %249 = vmatprep.subr.bf16.mxu0 0
    %250 = vmatpush1.bf16.msra.mxu0 0
    %251 = vmatprep.subr.bf16.mxu0 0
    %252 = vmatpush1.bf16.msra.mxu0 0
    %253 = vmatprep.subr.bf16.mxu0 0
    %254 = vmatpush1.bf16.msra.mxu0 0
    %255 = vmatprep.subr.bf16.mxu0 0
    %256 = vmatpush1.bf16.msra.mxu0 0
    %257 = vmatprep.subr.bf16.mxu0 0
    %258 = vmatpush1.bf16.msra.mxu0 0
    %259 = vmatprep.subr.bf16.mxu0 0
    %260 = vmatpush1.bf16.msra.mxu0 0
    %261 = vmatprep.subr.bf16.mxu0 0
    %262 = vmatpush1.bf16.msra.mxu0 0
    %263 = vmatprep.subr.bf16.mxu0 0
    %264 = vmatpush1.bf16.msra.mxu0 0
    %265 = vmatprep.subr.bf16.mxu0 0
    %266 = vmatpush1.bf16.msra.mxu0 0
    %267 = vmatprep.mubr.bf16.mxu0 0
    %268 = vmatmul.mubr.bf16.gmra.mrb[0].mxu0 %v233
    %v269 = vpop.f32.mrb[0].mxu0
    %v270 = vadd.f32 %v214, %v269
    %v271 = vpop.f32.mrb[0].mxu0
    %v272 = vpop.f32.mrb[0].mxu0
    %v273 = vadd.f32 %v217, %v272
    %v274 = vpop.f32.mrb[0].mxu0
    %275 = vdwg.mxu0
    %v276 = vld [vmem:[%s4] sm:$0x1]
    %v278 = vlaneseq
    %v279 = vshrl.u32 %v278, 7
    %v280 = vsub.s32 0, %v279
    %v281 = vrot.slane %v276, %v280
    %v283 = vadd.f32 %v270, %v281
    %v284 = vadd.f32 %v273, %v281
    %285 = vst [vmem:[#allocation8] sm:$0xff] %v283
    %286 = vst [vmem:[#allocation8 + $0x8] sm:$0xff] %v284
    %v287 = vlaneseq
    %v288 = vand.u32 %v287, 127
    %vm289 = vcmp.lt.s32.totalorder %v288, 8
    %v290 = vsel %vm289, %v283, -1e+30
    %v291 = vsel %vm289, %v284, -1e+30
    %292 = vmax.xlane.f32.xlu0 %v290
    %v293 = vpop.xlane.xlu0 %292
    %294 = vmax.xlane.f32.xlu0 %v291
    %v295 = vpop.xlane.xlu0 %294
    %v296 = vsub.f32 %v290, %v293
    %v297 = vsub.f32 %v291, %v295
    %v298 = vmul.f32 %v296, 1.442695
    %v299 = vpow.pop %v298
    %v300 = vmul.f32 %v297, 1.442695
    %v301 = vpow.pop %v300
    %302 = vadd.xlane.f32.xlu0 %v299
    %v303 = vpop.xlane.xlu0 %302
    %304 = vadd.xlane.f32.xlu0 %v301
    %v305 = vpop.xlane.xlu0 %304
    %v306 = vlog2.pop %v303
    %v307 = vmul.f32 %v306, 0.6931472
    %v308 = vlog2.pop %v305
    %v309 = vmul.f32 %v308, 0.6931472
    %v310 = vadd.f32 %v307, %v293
    %v311 = vadd.f32 %v309, %v295
    %v312 = vld [vmem:[%s5] sm:$0xff]
    %v313 = vld [vmem:[%s5 + $0x8] sm:$0xff]
    %vm314 = vcmp.ge.s32.totalorder %v312, 0
    %vm315 = vcmp.ge.s32.totalorder %v313, 0
    %v316 = vsel %vm314, 1, 0
    %v317 = vsel %vm315, 1, 0
    %v318 = vcvt.s32.f32 %v316
    %v319 = vcvt.s32.f32 %v317
    %320 = vset.pattern.permute.xlu0 0
    %321 = vperm.xlu0 %320, %v312
    %v322 = vpop.permute.xlu0 %321
    %323 = vset.pattern.permute.xlu0 0
    %324 = vperm.xlu0 %323, %v313
    %v325 = vpop.permute.xlu0 %324
    %vm326 = vcmp.eq.s32.totalorder %v288, %v322
    %vm327 = vcmp.eq.s32.totalorder %v288, %v325
    %v328 = vsel %vm326, %v283, 0.0
    %v329 = vsel %vm327, %v284, 0.0
    %330 = vadd.xlane.f32.xlu0 %v328
    %v331 = vpop.xlane.xlu0 %330
    %332 = vadd.xlane.f32.xlu0 %v329
    %v333 = vpop.xlane.xlu0 %332
    %v334 = vsub.f32 %v310, %v331
    %v335 = vsub.f32 %v311, %v333
    %v336 = vmul.f32 %v334, %v318
    %v337 = vmul.f32 %v335, %v319
    %vm338 = vcmask 7168
    %v339 = vsel %vm338, %v318, 0.0
    %v340 = vsel %vm338, %v319, 0.0
    %v341 = vadd.f32 %v339, %v340
    %342 = vadd.xlane.f32.xlu0 %v341
    %v343 = vpop.xlane.xlu0 %342
    %v344 = vrot.slane %v343, 4
    %v345 = vadd.f32 %v343, %v344
    %v346 = vrot.slane %v345, 2
    %v347 = vadd.f32 %v345, %v346
    %v348 = vrot.slane %v347, 1
    %v349 = vadd.f32 %v347, %v348
    %s350 = vtos %v349
    %s351 = smax.f32 %s350, 1.0
    %v352 = vsel %vm338, %v336, 0.0
    %v353 = vsel %vm338, %v337, 0.0
    %v354 = vadd.f32 %v352, %v353
    %355 = vadd.xlane.f32.xlu0 %v354
    %v356 = vpop.xlane.xlu0 %355
    %v357 = vrot.slane %v356, 4
    %v358 = vadd.f32 %v356, %v357
    %v359 = vrot.slane %v358, 2
    %v360 = vadd.f32 %v358, %v359
    %v361 = vrot.slane %v360, 1
    %v362 = vadd.f32 %v360, %v361
    %s363 = vtos %v362
    %v364 = vstv %s351
    %v365 = vrcp.pop %v364
    %s366 = vtos %v365
    %s367 = smul.f32 %s363, %s366
    %s368 = scalar_lea.smem [#allocation9], 0
    %369 = sst [smem:[%s368]] %s367
    // Predicated region
    $region34: #{tpu_custom_call.1} parent=1 // pred_check
      _
    $region35: #{tpu_custom_call.1} parent=1 // pred_check_branch
      %371 = sbr.rel (0) target = $region37
    $region36: #{tpu_custom_call.1} parent=1 // pred_region
      %s373 = ssub.s32 256, 256
      %374 = vsyncadd [#allocation4], %s373
      %s375 = sshll.u32 [#allocation8], 4
      %s376 = int_to_ptr.vmem [resolvable:$true] %s375
      %381 = dma.vmem_to_hbm [thread:$0]  %s376, 256, %s6, [#allocation4], 128, 128, 8
    $region37: #{tpu_custom_call.1} parent=1 // pred_fallthru
      _
    // Predicated region
    $region38: #{tpu_custom_call.1} parent=1 // pred_check
      _
    $region39: #{tpu_custom_call.1} parent=1 // pred_check_branch
      %383 = sbr.rel (0) target = $region41
    $region40: #{tpu_custom_call.1} parent=1 // pred_region
      %s385 = ssub.s32 16, 16
      %386 = vsyncadd [#allocation5], %s385
      %389 = dma.smem_to_hbm [#allocation9], 16, %s7, [#allocation5]
    $region41: #{tpu_custom_call.1} parent=1 // pred_fallthru
      _
    // Predicated region
    $region42: #{tpu_custom_call.1} parent=1 // pred_check
      _
    $region43: #{tpu_custom_call.1} parent=1 // pred_check_branch
      %391 = sbr.rel (0) target = $region45
    $region44: #{tpu_custom_call.1} parent=1 // pred_region
      %392 = dma.done [#allocation4], 256
    $region45: #{tpu_custom_call.1} parent=1 // pred_fallthru
      _
    // Predicated region
    $region46: #{tpu_custom_call.1} parent=1 // pred_check
      _
    $region47: #{tpu_custom_call.1} parent=1 // pred_check_branch
      %394 = sbr.rel (0) target = $region49
    $region48: #{tpu_custom_call.1} parent=1 // pred_region
      %395 = dma.done [#allocation5], 16
    $region49: #{tpu_custom_call.1} parent=1 // pred_fallthru
      _
    %396 = sfence
    %397 = vsyncpa [#allocation3], 1
    %398 = vsyncpa [#allocation7], 1
    %399 = vsyncpa [#allocation4], 1
    %400 = vsyncpa [#allocation5], 1

</llo_original>
